<compile_context>
chip_gen: v7x
topology: tpu7x:2x2x1
jax: 0.10.0
libtpu: 0.0.40
codegen_flags: <defaults>
</compile_context>

<pallas_src>
import functools

import jax
import jax.numpy as jnp
from jax.experimental import pallas as pl
from jax.experimental.pallas import tpu as pltpu

LANE = 128  # pad the output/tag axis up to a multiple of the 128-lane vreg width


def fused_mlp_logsoftmax_kernel(x_ref, w1_ref, b1_ref, w2_ref, b2_ref, o_ref):
    # fc1: (B, in) @ (in, hidden) + (1, hidden)
    h = jnp.dot(x_ref[...], w1_ref[...], preferred_element_type=jnp.float32)
    h = h + b1_ref[...]
    # fc2: (B, hidden) @ (hidden, LANE) + (1, LANE)   (tag axis pre-padded to LANE)
    logits = jnp.dot(h, w2_ref[...], preferred_element_type=jnp.float32)
    logits = logits + b2_ref[...]
    # log_softmax over dim=0 (the batch axis), matching F.log_softmax(x, dim=0).
    # Column-independent reduction -> zero-padded tag lanes never contaminate
    # the real ones (they just hold -log(B) and are sliced off by the caller).
    m = jnp.max(logits, axis=0, keepdims=True)
    shifted = logits - m
    lse = jnp.log(jnp.sum(jnp.exp(shifted), axis=0, keepdims=True))
    o_ref[...] = (shifted - lse).astype(o_ref.dtype)


def prepare_params(w1, b1, w2, b2):
    """Run ONCE at parameter-load time (off the hot path).

    Pads the tag axis of w2/b2 up to a multiple of 128 lanes so the kernel's
    output store is lane-dense (unmasked vst).
    """
    tag = w2.shape[1]
    pad = (-tag) % LANE
    w2p = jnp.pad(w2, ((0, 0), (0, pad)))
    b2p = jnp.pad(b2, ((0, 0), (0, pad)))
    return w1, b1, w2p, b2p, tag


@functools.partial(jax.jit, static_argnames="tag")
def mlp_logsoftmax(x, w1, b1, w2p, b2p, *, tag):
    """Hot path. x: (B, in); w1: (in, hidden); b1: (1, hidden);
    w2p: (hidden, LANE*k) pre-padded; b2p: (1, LANE*k) pre-padded."""
    B, In = x.shape
    H = w1.shape[1]
    L = w2p.shape[1]

    cost = pl.CostEstimate(
        flops=int(2 * B * In * H + 2 * B * H * L + 6 * B * L),
        transcendentals=int(B * L + L),
        bytes_accessed=int(4 * (B * In + In * H + H + H * L + L + B * L)),
    )

    vmem_spec = pl.BlockSpec(memory_space=pltpu.MemorySpace.VMEM)
    out_padded = pl.pallas_call(
        fused_mlp_logsoftmax_kernel,
        out_shape=jax.ShapeDtypeStruct((B, L), jnp.float32),
        in_specs=[vmem_spec, vmem_spec, vmem_spec, vmem_spec, vmem_spec],
        out_specs=vmem_spec,
        cost_estimate=cost,
    )(x, w1, b1, w2p, b2p)

    # TODO(synk): if many independent (B, in) instances exist, stack them and
    # add a leading "parallel" grid axis (dimension_semantics=("parallel",...))
    # with a larger effective M per step to use both v7x TensorCores and
    # amortize dispatch, instead of separate calls.

    # Slice stays inside this jit so XLA fuses it with the custom call's output.
    return out_padded[:, :tag]


def reference(x, w1, b1, w2, b2):
    h = x @ w1 + b1
    logits = h @ w2 + b2
    return jax.nn.log_softmax(logits, axis=0)


if __name__ == "__main__":
    key = jax.random.PRNGKey(0)
    batch, input_size, hidden_dim, tagset_size = 8, 32, 32, 16

    k1, k2, k3, k4, k5 = jax.random.split(key, 5)
    x = jax.random.normal(k1, (batch, input_size), dtype=jnp.float32)
    # Deterministic Linear-style uniform init, stored as (in, out).
    w1 = jax.random.uniform(k2, (input_size, hidden_dim), jnp.float32,
                            minval=-1.0 / input_size**0.5, maxval=1.0 / input_size**0.5)
    b1 = jax.random.uniform(k3, (1, hidden_dim), jnp.float32,
                            minval=-1.0 / input_size**0.5, maxval=1.0 / input_size**0.5)
    w2 = jax.random.uniform(k4, (hidden_dim, tagset_size), jnp.float32,
                            minval=-1.0 / hidden_dim**0.5, maxval=1.0 / hidden_dim**0.5)
    b2 = jax.random.uniform(k5, (hidden_dim := hidden_dim, tagset_size) if False else (1, tagset_size),
                            jnp.float32,
                            minval=-1.0 / hidden_dim**0.5, maxval=1.0 / hidden_dim**0.5)

    # One-time parameter preparation (padding) -- NOT on the per-call path.
    w1p, b1p, w2p, b2p, tag = prepare_params(w1, b1, w2, b2)

    out = mlp_logsoftmax(x, w1p, b1p, w2p, b2p, tag=tag)
    jax.block_until_ready(out)

    ref = reference(x, w1, b1, w2, b2)
    assert out.shape == (batch, tagset_size)
    assert jnp.allclose(out, ref, atol=2e-5, rtol=2e-5), "mismatch vs reference"
    print("KERNEL_OK")
</pallas_src>

<mosaic_0001>
module attributes {stable_mosaic.version = 11 : i64} {
  func.func @fused_mlp_logsoftmax_kernel(%arg0: memref<8x32xf32, #tpu.memory_space<vmem>>, %arg1: memref<32x32xf32, #tpu.memory_space<vmem>>, %arg2: memref<1x32xf32, #tpu.memory_space<vmem>>, %arg3: memref<32x128xf32, #tpu.memory_space<vmem>>, %arg4: memref<1x128xf32, #tpu.memory_space<vmem>>, %arg5: memref<8x128xf32, #tpu.memory_space<vmem>>) attributes {dimension_semantics = [], scalar_prefetch = 0 : i64, scratch_operands = 0 : i64, tpu.core_type = #tpu.core_type<tc>} {
    %c0 = arith.constant 0 : index
    %c0_0 = arith.constant 0 : index
    %0 = vector.load %arg0[%c0, %c0_0] : memref<8x32xf32, #tpu.memory_space<vmem>>, vector<8x32xf32>
    %c0_1 = arith.constant 0 : index
    %c0_2 = arith.constant 0 : index
    %1 = vector.load %arg1[%c0_1, %c0_2] : memref<32x32xf32, #tpu.memory_space<vmem>>, vector<32x32xf32>
    %cst = arith.constant dense<0.000000e+00> : vector<8x32xf32>
    %2 = tpu.matmul %0, %1, %cst {dimension_numbers = #tpu.dot_dimension_numbers<[1], [0], [0], [1], [0, 0, 1, 1], [], []>} : vector<8x32xf32>, vector<32x32xf32>, vector<8x32xf32> -> vector<8x32xf32>
    %c0_3 = arith.constant 0 : index
    %c0_4 = arith.constant 0 : index
    %3 = vector.load %arg2[%c0_3, %c0_4] : memref<1x32xf32, #tpu.memory_space<vmem>>, vector<1x32xf32>
    %4 = vector.broadcast %3 : vector<1x32xf32> to vector<8x32xf32>
    %5 = arith.addf %2, %4 : vector<8x32xf32>
    %c0_5 = arith.constant 0 : index
    %c0_6 = arith.constant 0 : index
    %6 = vector.load %arg3[%c0_5, %c0_6] : memref<32x128xf32, #tpu.memory_space<vmem>>, vector<32x128xf32>
    %cst_7 = arith.constant dense<0.000000e+00> : vector<8x128xf32>
    %7 = tpu.matmul %5, %6, %cst_7 {dimension_numbers = #tpu.dot_dimension_numbers<[1], [0], [0], [1], [0, 0, 1, 1], [], []>} : vector<8x32xf32>, vector<32x128xf32>, vector<8x128xf32> -> vector<8x128xf32>
    %c0_8 = arith.constant 0 : index
    %c0_9 = arith.constant 0 : index
    %8 = vector.load %arg4[%c0_8, %c0_9] : memref<1x128xf32, #tpu.memory_space<vmem>>, vector<1x128xf32>
    %9 = vector.broadcast %8 : vector<1x128xf32> to vector<8x128xf32>
    %10 = arith.addf %7, %9 : vector<8x128xf32>
    %cst_10 = arith.constant dense<0xFF800000> : vector<128xf32>
    %11 = vector.multi_reduction <maximumf>, %10, %cst_10 [0] : vector<8x128xf32> to vector<128xf32>
    %12 = vector.shape_cast %11 : vector<128xf32> to vector<1x128xf32>
    %13 = vector.broadcast %12 : vector<1x128xf32> to vector<8x128xf32>
    %14 = arith.subf %10, %13 : vector<8x128xf32>
    %15 = math.exp %14 : vector<8x128xf32>
    %cst_11 = arith.constant dense<0.000000e+00> : vector<128xf32>
    %16 = vector.multi_reduction <add>, %15, %cst_11 [0] : vector<8x128xf32> to vector<128xf32>
    %17 = vector.shape_cast %16 : vector<128xf32> to vector<1x128xf32>
    %18 = math.log %17 : vector<1x128xf32>
    %19 = vector.broadcast %18 : vector<1x128xf32> to vector<8x128xf32>
    %20 = arith.subf %14, %19 : vector<8x128xf32>
    %c0_12 = arith.constant 0 : index
    %c0_13 = arith.constant 0 : index
    %21 = vector.load %arg5[%c0_12, %c0_13] : memref<8x128xf32, #tpu.memory_space<vmem>>, vector<8x128xf32>
    tpu.vector_store %arg5[%c0_12, %c0_13], %20 {strides = array<i32>} : memref<8x128xf32, #tpu.memory_space<vmem>>, vector<8x128xf32>,
    return
  }
}

</mosaic_0001>

<llo_original>
// kernel: mlp_logsoftmax.1
$region0: #{mlp_logsoftmax.1}
  #allocation0 [shape = 'u32[]', space=smem, size = 0x4, offset = 0x4, fixed_abs, tag = 'smem constant byte address 0x4 - core index']
  #allocation1 [shape = 'u32[144,128]{1,0:T(1,128)}', space=vmem, size = 0x12000, scoped, tag = 'internal scratch']
  %s0 = inlined_call_operand.hbm [shape: f32[8,32], index: 0, kind: input, shape index: {}]
  %s1 = inlined_call_operand.hbm [shape: f32[32,32], index: 1, kind: input, shape index: {}]
  %s2 = inlined_call_operand.vmem [shape: f32[1,32], index: 2, kind: input, shape index: {}]
  %s3 = inlined_call_operand.hbm [shape: f32[32,128], index: 3, kind: input, shape index: {}]
  %s4 = inlined_call_operand.vmem [shape: f32[1,128], index: 4, kind: input, shape index: {}]
  %s5 = inlined_call_operand.hbm [shape: f32[8,128], index: 5, kind: output, shape index: {}]
  %s6 = sld [smem:[#allocation0]]
  $region42: #{mlp_logsoftmax.1} parent=0
    _
  %s8 = ssub.s32 1, %s6
  %s9 = scalar_select 0, %s8, %s6
  $region1: #{mlp_logsoftmax.1} parent=0
    #allocation2 [shape = 'u8[4096]{0}', space=vmem, size = 0x1000, scoped, tag = 'input window, operand 0, single buffered']
    #allocation3 [shape = 's32[1]{0}', space=sflag, size = 0x4, scoped, tag = 'scoped memory for mlp_logsoftmax.1']
    #allocation4 [shape = 's32[1]{0}', space=sflag, size = 0x4, scoped, tag = 'scoped memory for mlp_logsoftmax.1']
    #allocation5 [shape = 'u8[16384]{0}', space=vmem, size = 0x4000, scoped, tag = 'input window, operand 1, single buffered']
    #allocation6 [shape = 's32[1]{0}', space=sflag, size = 0x4, scoped, tag = 'scoped memory for mlp_logsoftmax.1']
    #allocation7 [shape = 'u8[16384]{0}', space=vmem, size = 0x4000, scoped, tag = 'input window, operand 3, single buffered']
    #allocation8 [shape = 'u8[4096]{0}', space=vmem, size = 0x1000, scoped, tag = 'output window, operand 0, single buffered']
    %10 = vsyncpa [#allocation3], 0
    %11 = vsyncpa [#allocation6], 0
    %12 = vsyncpa [#allocation4], 0
    // Predicated region
    $region2: #{mlp_logsoftmax.1} parent=1 // pred_check
      _
    $region3: #{mlp_logsoftmax.1} parent=1 // pred_check_branch
      %14 = sbr.rel (0) target = $region5
    $region4: #{mlp_logsoftmax.1} parent=1 // pred_region
      %s16 = ssub.s32 128, 128
      %17 = vsyncadd [#allocation3], %s16
      %s19 = sshll.u32 [#allocation2], 4
      %s20 = int_to_ptr.vmem [resolvable:$true] %s19
      %22 = dma.hbm_to_vmem [thread:$0]  %s0, 128, %s20, [#allocation3]
    $region5: #{mlp_logsoftmax.1} parent=1 // pred_fallthru
      _
    // Predicated region
    $region6: #{mlp_logsoftmax.1} parent=1 // pred_check
      _
    $region7: #{mlp_logsoftmax.1} parent=1 // pred_check_branch
      %24 = sbr.rel (0) target = $region9
    $region8: #{mlp_logsoftmax.1} parent=1 // pred_region
      %s26 = ssub.s32 512, 512
      %27 = vsyncadd [#allocation6], %s26
      %s28 = sshll.u32 [#allocation5], 4
      %s29 = int_to_ptr.vmem [resolvable:$true] %s28
      %34 = dma.hbm_to_vmem [thread:$0]  %s1, 512, %s29, [#allocation6], 128, 128, 8
    $region9: #{mlp_logsoftmax.1} parent=1 // pred_fallthru
      _
    // Predicated region
    $region10: #{mlp_logsoftmax.1} parent=1 // pred_check
      _
    $region11: #{mlp_logsoftmax.1} parent=1 // pred_check_branch
      %36 = sbr.rel (0) target = $region13
    $region12: #{mlp_logsoftmax.1} parent=1 // pred_region
      _
    $region13: #{mlp_logsoftmax.1} parent=1 // pred_fallthru
      _
    // Predicated region
    $region14: #{mlp_logsoftmax.1} parent=1 // pred_check
      _
    $region15: #{mlp_logsoftmax.1} parent=1 // pred_check_branch
      %38 = sbr.rel (0) target = $region17
    $region16: #{mlp_logsoftmax.1} parent=1 // pred_region
      %s40 = ssub.s32 512, 512
      %41 = vsyncadd [#allocation6], %s40
      %s42 = sshll.u32 [#allocation7], 4
      %s43 = int_to_ptr.vmem [resolvable:$true] %s42
      %48 = dma.hbm_to_vmem [thread:$0]  %s3, 512, %s43, [#allocation6], 128, 128, 8
    $region17: #{mlp_logsoftmax.1} parent=1 // pred_fallthru
      _
    // Predicated region
    $region18: #{mlp_logsoftmax.1} parent=1 // pred_check
      _
    $region19: #{mlp_logsoftmax.1} parent=1 // pred_check_branch
      %50 = sbr.rel (0) target = $region21
    $region20: #{mlp_logsoftmax.1} parent=1 // pred_region
      _
    $region21: #{mlp_logsoftmax.1} parent=1 // pred_fallthru
      _
    // Predicated region
    $region22: #{mlp_logsoftmax.1} parent=1 // pred_check
      _
    $region23: #{mlp_logsoftmax.1} parent=1 // pred_check_branch
      %52 = sbr.rel (0) target = $region25
    $region24: #{mlp_logsoftmax.1} parent=1 // pred_region
      %53 = dma.done [#allocation3], 128
    $region25: #{mlp_logsoftmax.1} parent=1 // pred_fallthru
      _
    // Predicated region
    $region26: #{mlp_logsoftmax.1} parent=1 // pred_check
      _
    $region27: #{mlp_logsoftmax.1} parent=1 // pred_check_branch
      %55 = sbr.rel (0) target = $region29
    $region28: #{mlp_logsoftmax.1} parent=1 // pred_region
      %56 = dma.done [#allocation6], 512
    $region29: #{mlp_logsoftmax.1} parent=1 // pred_fallthru
      _
    // Predicated region
    $region30: #{mlp_logsoftmax.1} parent=1 // pred_check
      _
    $region31: #{mlp_logsoftmax.1} parent=1 // pred_check_branch
      %58 = sbr.rel (0) target = $region33
    $region32: #{mlp_logsoftmax.1} parent=1 // pred_region
      %59 = dma.done [#allocation6], 512
    $region33: #{mlp_logsoftmax.1} parent=1 // pred_fallthru
      _
    %v60 = vld [vmem:[#allocation2] sm:$0xff]
    %v61 = vld [vmem:[#allocation5] sm:$0xff]
    %v62 = vld [vmem:[#allocation5 + $0x8] sm:$0xff]
    %v63 = vld [vmem:[#allocation5 + $0x10] sm:$0xff]
    %v64 = vld [vmem:[#allocation5 + $0x18] sm:$0xff]
    %v65 = vld [vmem:[%s2] sm:$0x1]
    %v67 = vlaneseq
    %v68 = vshrl.u32 %v67, 7
    %v69 = vsub.s32 0, %v68
    %v70 = vrot.slane %v65, %v69
    %vm72 = vcmask 261120
    %v74 = vsel %vm72, %v60, 0
    %76 = vmatprep.subr.mxu0 0.0
    %77 = vmatpush1.msra.mxu0 %v61
    %78 = vmatprep.subr.mxu0 0.0
    %79 = vmatpush1.msra.mxu0 %v62
    %80 = vmatprep.subr.mxu0 0.0
    %81 = vmatpush1.msra.mxu0 %v63
    %82 = vmatprep.subr.mxu0 0.0
    %83 = vmatpush1.msra.mxu0 %v64
    %84 = vmatprep.subr.mxu0 0.0
    %85 = vmatpush1.msra.mxu0 0.0
    %86 = vmatprep.subr.mxu0 0.0
    %87 = vmatpush1.msra.mxu0 0.0
    %88 = vmatprep.subr.mxu0 0.0
    %89 = vmatpush1.msra.mxu0 0.0
    %90 = vmatprep.subr.mxu0 0.0
    %91 = vmatpush1.msra.mxu0 0.0
    %92 = vmatprep.subr.mxu0 0.0
    %93 = vmatpush1.msra.mxu0 0.0
    %94 = vmatprep.subr.mxu0 0.0
    %95 = vmatpush1.msra.mxu0 0.0
    %96 = vmatprep.subr.mxu0 0.0
    %97 = vmatpush1.msra.mxu0 0.0
    %98 = vmatprep.subr.mxu0 0.0
    %99 = vmatpush1.msra.mxu0 0.0
    %100 = vmatprep.subr.mxu0 0.0
    %101 = vmatpush1.msra.mxu0 0.0
    %102 = vmatprep.subr.mxu0 0.0
    %103 = vmatpush1.msra.mxu0 0.0
    %104 = vmatprep.subr.mxu0 0.0
    %105 = vmatpush1.msra.mxu0 0.0
    %106 = vmatprep.subr.mxu0 0.0
    %107 = vmatpush1.msra.mxu0 0.0
    %108 = vmatprep.subr.mxu0 0.0
    %109 = vmatpush1.msra.mxu0 0.0
    %110 = vmatprep.subr.mxu0 0.0
    %111 = vmatpush1.msra.mxu0 0.0
    %112 = vmatprep.subr.mxu0 0.0
    %113 = vmatpush1.msra.mxu0 0.0
    %114 = vmatprep.subr.mxu0 0.0
    %115 = vmatpush1.msra.mxu0 0.0
    %116 = vmatprep.subr.mxu0 0.0
    %117 = vmatpush1.msra.mxu0 0.0
    %118 = vmatprep.subr.mxu0 0.0
    %119 = vmatpush1.msra.mxu0 0.0
    %120 = vmatprep.subr.mxu0 0.0
    %121 = vmatpush1.msra.mxu0 0.0
    %122 = vmatprep.subr.mxu0 0.0
    %123 = vmatpush1.msra.mxu0 0.0
    %124 = vmatprep.subr.mxu0 0.0
    %125 = vmatpush1.msra.mxu0 0.0
    %126 = vmatprep.subr.mxu0 0.0
    %127 = vmatpush1.msra.mxu0 0.0
    %128 = vmatprep.subr.mxu0 0.0
    %129 = vmatpush1.msra.mxu0 0.0
    %130 = vmatprep.subr.mxu0 0.0
    %131 = vmatpush1.msra.mxu0 0.0
    %132 = vmatprep.subr.mxu0 0.0
    %133 = vmatpush1.msra.mxu0 0.0
    %134 = vmatprep.subr.mxu0 0.0
    %135 = vmatpush1.msra.mxu0 0.0
    %136 = vmatprep.subr.mxu0 0.0
    %137 = vmatpush1.msra.mxu0 0.0
    %138 = vmatprep.subr.mxu0 0.0
    %139 = vmatpush1.msra.mxu0 0.0
    %140 = vmatprep.mubr.f32.mxu0 0.0
    %141 = vmatmul.mubr.f32.gmra.mrb[0].mxu0 %v74
    %v142 = vpop.f32.mrb[0].mxu0
    %v143 = vadd.f32 %v70, %v142
    %v144 = vpop.f32.mrb[0].mxu0
    %145 = vdwg.mxu0
    %v146 = vld [vmem:[#allocation7] sm:$0xff]
    %v147 = vld [vmem:[#allocation7 + $0x8] sm:$0xff]
    %v148 = vld [vmem:[#allocation7 + $0x10] sm:$0xff]
    %v149 = vld [vmem:[#allocation7 + $0x18] sm:$0xff]
    %v150 = vld [vmem:[%s4] sm:$0x1]
    %v152 = vlaneseq
    %v153 = vshrl.u32 %v152, 7
    %v154 = vsub.s32 0, %v153
    %v155 = vrot.slane %v150, %v154
    %v158 = vsel %vm72, %v143, 0
    %160 = vmatprep.subr.mxu0 0.0
    %161 = vmatpush1.msra.mxu0 %v146
    %162 = vmatprep.subr.mxu0 0.0
    %163 = vmatpush1.msra.mxu0 %v147
    %164 = vmatprep.subr.mxu0 0.0
    %165 = vmatpush1.msra.mxu0 %v148
    %166 = vmatprep.subr.mxu0 0.0
    %167 = vmatpush1.msra.mxu0 %v149
    %168 = vmatprep.subr.mxu0 0.0
    %169 = vmatpush1.msra.mxu0 0.0
    %170 = vmatprep.subr.mxu0 0.0
    %171 = vmatpush1.msra.mxu0 0.0
    %172 = vmatprep.subr.mxu0 0.0
    %173 = vmatpush1.msra.mxu0 0.0
    %174 = vmatprep.subr.mxu0 0.0
    %175 = vmatpush1.msra.mxu0 0.0
    %176 = vmatprep.subr.mxu0 0.0
    %177 = vmatpush1.msra.mxu0 0.0
    %178 = vmatprep.subr.mxu0 0.0
    %179 = vmatpush1.msra.mxu0 0.0
    %180 = vmatprep.subr.mxu0 0.0
    %181 = vmatpush1.msra.mxu0 0.0
    %182 = vmatprep.subr.mxu0 0.0
    %183 = vmatpush1.msra.mxu0 0.0
    %184 = vmatprep.subr.mxu0 0.0
    %185 = vmatpush1.msra.mxu0 0.0
    %186 = vmatprep.subr.mxu0 0.0
    %187 = vmatpush1.msra.mxu0 0.0
    %188 = vmatprep.subr.mxu0 0.0
    %189 = vmatpush1.msra.mxu0 0.0
    %190 = vmatprep.subr.mxu0 0.0
    %191 = vmatpush1.msra.mxu0 0.0
    %192 = vmatprep.subr.mxu0 0.0
    %193 = vmatpush1.msra.mxu0 0.0
    %194 = vmatprep.subr.mxu0 0.0
    %195 = vmatpush1.msra.mxu0 0.0
    %196 = vmatprep.subr.mxu0 0.0
    %197 = vmatpush1.msra.mxu0 0.0
    %198 = vmatprep.subr.mxu0 0.0
    %199 = vmatpush1.msra.mxu0 0.0
    %200 = vmatprep.subr.mxu0 0.0
    %201 = vmatpush1.msra.mxu0 0.0
    %202 = vmatprep.subr.mxu0 0.0
    %203 = vmatpush1.msra.mxu0 0.0
    %204 = vmatprep.subr.mxu0 0.0
    %205 = vmatpush1.msra.mxu0 0.0
    %206 = vmatprep.subr.mxu0 0.0
    %207 = vmatpush1.msra.mxu0 0.0
    %208 = vmatprep.subr.mxu0 0.0
    %209 = vmatpush1.msra.mxu0 0.0
    %210 = vmatprep.subr.mxu0 0.0
    %211 = vmatpush1.msra.mxu0 0.0
    %212 = vmatprep.subr.mxu0 0.0
    %213 = vmatpush1.msra.mxu0 0.0
    %214 = vmatprep.subr.mxu0 0.0
    %215 = vmatpush1.msra.mxu0 0.0
    %216 = vmatprep.subr.mxu0 0.0
    %217 = vmatpush1.msra.mxu0 0.0
    %218 = vmatprep.subr.mxu0 0.0
    %219 = vmatpush1.msra.mxu0 0.0
    %220 = vmatprep.subr.mxu0 0.0
    %221 = vmatpush1.msra.mxu0 0.0
    %222 = vmatprep.subr.mxu0 0.0
    %223 = vmatpush1.msra.mxu0 0.0
    %224 = vmatprep.mubr.f32.mxu0 0.0
    %225 = vmatmul.mubr.f32.gmra.mrb[0].mxu0 %v158
    %v226 = vpop.f32.mrb[0].mxu0
    %v227 = vadd.f32 %v155, %v226
    %v228 = vpop.f32.mrb[0].mxu0
    %229 = vdwg.mxu0
    %v230 = vrot.slane %v227, 4
    %v231 = vmax.f32 %v227, %v230
    %v232 = vrot.slane %v231, 2
    %v233 = vmax.f32 %v231, %v232
    %v234 = vrot.slane %v233, 1
    %v235 = vmax.f32 %v233, %v234
    %v236 = vsub.f32 %v227, %v235
    %v237 = vmul.f32 %v236, 1.442695
    %v238 = vpow.pop %v237
    %v239 = vrot.slane %v238, 4
    %v240 = vadd.f32 %v238, %v239
    %v241 = vrot.slane %v240, 2
    %v242 = vadd.f32 %v240, %v241
    %v243 = vrot.slane %v242, 1
    %v244 = vadd.f32 %v242, %v243
    %v245 = vlog2.pop %v244
    %v246 = vmul.f32 %v245, 0.6931472
    %v247 = vsub.f32 %v236, %v246
    %248 = vst [vmem:[#allocation8] sm:$0xff] %v247
    // Predicated region
    $region34: #{mlp_logsoftmax.1} parent=1 // pred_check
      _
    $region35: #{mlp_logsoftmax.1} parent=1 // pred_check_branch
      %250 = sbr.rel (0) target = $region37
    $region36: #{mlp_logsoftmax.1} parent=1 // pred_region
      %s252 = ssub.s32 128, 128
      %253 = vsyncadd [#allocation4], %s252
      %s255 = sshll.u32 [#allocation8], 4
      %s256 = int_to_ptr.vmem [resolvable:$true] %s255
      %258 = dma.vmem_to_hbm [thread:$0]  %s256, 128, %s5, [#allocation4]
    $region37: #{mlp_logsoftmax.1} parent=1 // pred_fallthru
      _
    // Predicated region
    $region38: #{mlp_logsoftmax.1} parent=1 // pred_check
      _
    $region39: #{mlp_logsoftmax.1} parent=1 // pred_check_branch
      %260 = sbr.rel (0) target = $region41
    $region40: #{mlp_logsoftmax.1} parent=1 // pred_region
      %261 = dma.done [#allocation4], 128
    $region41: #{mlp_logsoftmax.1} parent=1 // pred_fallthru
      _
    %262 = vsyncpa [#allocation3], 1
    %263 = vsyncpa [#allocation6], 1
    %264 = vsyncpa [#allocation4], 1

</llo_original>
